<compile_context>
chip_gen: v5e
topology: v5e:2x2
jax: 0.10.0
libtpu: 0.0.40
codegen_flags: <defaults>
</compile_context>

<pallas_src>
import math
import functools

import jax
import jax.numpy as jnp
from jax.experimental import pallas as pl
from jax.experimental.pallas import tpu as pltpu


_LANE = 128       # vreg lane width (last dim)
_SUBLANE = 8      # vreg sublane count (second-last dim)
_TM_TARGET = 256  # row-tile target for large batches
_MIB = 1 << 20


def _round_up(n, m):
    return ((n + m - 1) // m) * m


def _pick_tile(dim, target):
    """Largest multiple of 128 <= target that divides dim (dim % 128 == 0)."""
    t = min(dim, max(_LANE, (target // _LANE) * _LANE))
    while dim % t:
        t -= _LANE
    return t


def _vmem_capacity_bytes():
    """Physical per-core VMEM; fall back to the most restrictive chip (v7x)."""
    try:
        return int(pltpu.get_tpu_info().vmem_capacity_bytes)
    except Exception:
        return 64 * _MIB


def _compiler_params(dim_sem, vmem_needed, vmem_cap):
    limit = int(min(max(vmem_needed, 32 * _MIB), int(vmem_cap * 0.9)))
    return pltpu.CompilerParams(dimension_semantics=dim_sem,
                                vmem_limit_bytes=limit)


# --------------------------------------------------------------------------
# Fully-fused path: all weights resident in VMEM, one grid axis over rows.
# --------------------------------------------------------------------------
def _mlp_fused_kernel(x_ref, *refs, num_layers):
    """x_ref: (tm, K0p) bf16; refs = num_layers weight refs then the out ref."""
    w_refs = refs[:num_layers]
    o_ref = refs[num_layers]

    act = x_ref[...]                                       # bf16
    for li in range(num_layers):
        acc = jnp.dot(act, w_refs[li][...],
                      preferred_element_type=jnp.float32)  # MXU, f32 acc
        if li + 1 < num_layers:
            # ReLU once per intermediate element; keep MXU inputs bf16.
            act = jnp.maximum(acc, 0.0).astype(jnp.bfloat16)
        else:
            o_ref[...] = acc.astype(o_ref.dtype)


def _fused_mlp(x_p, weights_p, tm, out_dtype, vmem_cap):
    """x_p: (Mp, K0p) bf16; weights_p: list of (Kip, K(i+1)p) bf16."""
    Mp, K0p = x_p.shape
    num_layers = len(weights_p)
    KLp = weights_p[-1].shape[1]
    out_bytes = jnp.dtype(out_dtype).itemsize

    flops = 0
    bytes_accessed = x_p.size * 2 + Mp * KLp * out_bytes
    weight_bytes = 0
    max_dim = K0p
    for w in weights_p:
        flops += 2 * Mp * w.shape[0] * w.shape[1]
        bytes_accessed += w.size * 2
        weight_bytes += int(w.size) * 2
        max_dim = max(max_dim, w.shape[1])

    # VMEM budget: single-buffered resident weights + double-buffered x/out
    # tiles + live f32 accumulator / bf16 activation temporaries, +20%.
    vmem_needed = int(1.2 * (weight_bytes
                             + 2 * tm * K0p * 2
                             + 2 * tm * KLp * out_bytes
                             + tm * max_dim * (4 + 2)))

    kernel = functools.partial(_mlp_fused_kernel, num_layers=num_layers)

    def build_call(single_buffer_weights):
        in_specs = [pl.BlockSpec((tm, K0p), lambda i: (i, 0))]
        for w in weights_p:
            kin, kout = w.shape
            if single_buffer_weights:
                # Constant index_map -> one resident buffer is enough.
                spec = pl.BlockSpec((kin, kout), lambda i: (0, 0),
                                    pipeline_mode=pl.Buffered(1))
            else:
                spec = pl.BlockSpec((kin, kout), lambda i: (0, 0))
            in_specs.append(spec)

        return pl.pallas_call(
            kernel,
            out_shape=jax.ShapeDtypeStruct((Mp, KLp), out_dtype),
            grid_spec=pltpu.PrefetchScalarGridSpec(
                num_scalar_prefetch=0,
                grid=(Mp // tm,),
                in_specs=in_specs,
                out_specs=pl.BlockSpec((tm, KLp), lambda i: (i, 0)),
            ),
            compiler_params=_compiler_params(("parallel",), vmem_needed, vmem_cap),
            cost_estimate=pl.CostEstimate(
                flops=flops, transcendentals=0, bytes_accessed=bytes_accessed),
        )

    try:
        return build_call(True)(x_p, *weights_p)
    except Exception:
        # Robustness fallback if Buffered(1) is rejected by this JAX build.
        return build_call(False)(x_p, *weights_p)


# --------------------------------------------------------------------------
# Fallback path: per-layer M/N/K-tiled matmul with fused ReLU epilogue.
# Used when the full weight set does not fit the VMEM budget (e.g. v7x 64 MiB).
# --------------------------------------------------------------------------
def _linear_relu_kernel(x_ref, w_ref, o_ref, acc_ref, *, apply_relu):
    k = pl.program_id(2)

    @pl.when(k == 0)
    def _():
        acc_ref[...] = jnp.zeros_like(acc_ref)

    acc_ref[...] += jnp.dot(x_ref[...], w_ref[...],
                            preferred_element_type=jnp.float32)

    @pl.when(k == pl.num_programs(2) - 1)
    def _():
        r = acc_ref[...]
        if apply_relu:
            r = jnp.maximum(r, 0.0)
        o_ref[...] = r.astype(o_ref.dtype)


def _tiled_linear(x_p, w_p, tm, apply_relu, out_dtype, vmem_cap):
    Mp, Kp = x_p.shape
    _, Np = w_p.shape
    tn = _pick_tile(Np, 256)
    tk = _pick_tile(Kp, 512)
    out_bytes = jnp.dtype(out_dtype).itemsize

    vmem_needed = int(1.2 * (2 * tm * tk * 2 + 2 * tk * tn * 2
                             + 2 * tm * tn * out_bytes + tm * tn * 4))

    kernel = functools.partial(_linear_relu_kernel, apply_relu=apply_relu)
    return pl.pallas_call(
        kernel,
        out_shape=jax.ShapeDtypeStruct((Mp, Np), out_dtype),
        grid_spec=pltpu.PrefetchScalarGridSpec(
            num_scalar_prefetch=0,
            grid=(Mp // tm, Np // tn, Kp // tk),
            in_specs=[pl.BlockSpec((tm, tk), lambda i, j, k: (i, k)),
                      pl.BlockSpec((tk, tn), lambda i, j, k: (k, j))],
            out_specs=pl.BlockSpec((tm, tn), lambda i, j, k: (i, j)),
            scratch_shapes=[pltpu.VMEM((tm, tn), jnp.float32)],
        ),
        compiler_params=_compiler_params(("parallel", "parallel", "arbitrary"),
                                         vmem_needed, vmem_cap),
        cost_estimate=pl.CostEstimate(
            flops=2 * Mp * Kp * Np, transcendentals=0,
            bytes_accessed=x_p.size * 2 + w_p.size * 2 + Mp * Np * out_bytes),
    )(x_p, w_p)


# --------------------------------------------------------------------------
# Module wrapper (forward-pass equivalent of the PyTorch MLP).
# --------------------------------------------------------------------------
class MLPPallas:
    """Bias-free Linear chain with ReLU between layers (not after the last)."""

    def __init__(self, layer_dims, init_scale=1.0, key=None,
                 out_dtype=jnp.float32, force_fallback=False):
        self._n_units = list(layer_dims)
        self._out_dtype = out_dtype
        self._force_fallback = force_fallback
        if key is None:
            key = jax.random.PRNGKey(0)

        self._weights_t = []      # f32 (in, out), reference math
        self._weights_t_pad = []  # bf16, zero-padded to lane multiples (kernel operands)
        for i in range(1, len(layer_dims)):
            key, sub = jax.random.split(key)
            fan_in, fan_out = layer_dims[i - 1], layer_dims[i]
            variance = math.sqrt(2.0 / (fan_in + fan_out))
            # PyTorch weight is (out, in) ~ N(0, init_scale*variance).
            w = jax.random.normal(sub, (fan_out, fan_in), jnp.float32)
            w = w * (init_scale * variance)
            w_t = jnp.transpose(w)                      # (in, out)
            self._weights_t.append(w_t)

            in_p = _round_up(fan_in, _LANE)
            out_p = _round_up(fan_out, _LANE)
            w_bf = w_t.astype(jnp.bfloat16)
            if (in_p, out_p) != (fan_in, fan_out):
                w_bf = jnp.pad(w_bf, ((0, in_p - fan_in), (0, out_p - fan_out)))
            self._weights_t_pad.append(w_bf)
        # TODO(synk): optional fp8 weight storage on v7x (halves resident VMEM,
        # ~2x MXU peak) once accuracy tolerance is established.

    def __call__(self, x):
        k0 = self._n_units[0]
        kL = self._n_units[-1]
        M = int(x.size) // k0
        x2d = jnp.reshape(x, (M, k0))
        if not self._weights_t_pad:        # degenerate: no layers
            return x2d.astype(jnp.float32)

        k0p = _round_up(k0, _LANE)
        kLp = self._weights_t_pad[-1].shape[1]

        # Row tiling: prefer >=2 grid steps so megacore (v7x) shards rows
        # across both TensorCores; large batches use _TM_TARGET-row tiles.
        if M >= 2 * _TM_TARGET:
            tm = _TM_TARGET
        else:
            tm = max(_SUBLANE, _round_up(-(-M // 2), _SUBLANE))
        Mp = _round_up(M, tm)

        # Cast to bf16 once; pad only when actually needed (no f32 intermediate).
        x_bf = x2d.astype(jnp.bfloat16)
        if (Mp, k0p) != (M, k0):
            x_bf = jnp.pad(x_bf, ((0, Mp - M), (0, k0p - k0)))

        vmem_cap = _vmem_capacity_bytes()
        out_bytes = jnp.dtype(self._out_dtype).itemsize
        weight_bytes = sum(int(w.size) * 2 for w in self._weights_t_pad)
        max_dim = max([k0p] + [w.shape[1] for w in self._weights_t_pad])
        fused_need = int(1.2 * (weight_bytes
                                + 2 * tm * k0p * 2
                                + 2 * tm * kLp * out_bytes
                                + tm * max_dim * (4 + 2)))

        if (not self._force_fallback) and fused_need <= int(0.75 * vmem_cap):
            out_p = _fused_mlp(x_bf, self._weights_t_pad, tm,
                               self._out_dtype, vmem_cap)
        else:
            # Per-layer tiled fallback (weights streamed per layer; intermediate
            # activations stay bf16 and lane-padded).
            act = x_bf
            n_layers = len(self._weights_t_pad)
            for li, w in enumerate(self._weights_t_pad):
                last = li + 1 == n_layers
                act = _tiled_linear(
                    act, w, tm,
                    apply_relu=not last,
                    out_dtype=self._out_dtype if last else jnp.bfloat16,
                    vmem_cap=vmem_cap)
            out_p = act

        return out_p[:M, :kL]


if __name__ == "__main__":
    key = jax.random.PRNGKey(0)
    k_x, k_w = jax.random.split(key)

    # Small shapes: input (2, 4, 16, 16) -> view(-1, 256) -> (8, 256)
    layer_dims = [256, 128, 64]
    x = jax.random.normal(k_x, (2, 4, 16, 16), jnp.float32)

    # Reference with the same bf16-input / f32-accumulate math as the kernels.
    def reference(model, x):
        act = jnp.reshape(x, (-1, layer_dims[0]))
        act = act.astype(jnp.bfloat16).astype(jnp.float32)
        ws = [w.astype(jnp.bfloat16).astype(jnp.float32) for w in model._weights_t]
        ref = act @ ws[0]
        for w in ws[1:]:
            ref = jnp.maximum(ref, 0.0).astype(jnp.bfloat16).astype(jnp.float32) @ w
        return ref

    # 1) Fully-fused path.
    model = MLPPallas(layer_dims, init_scale=1.0, key=k_w)
    out = jax.block_until_ready(model(x))
    assert out.shape == (8, layer_dims[-1])
    ref = reference(model, x)
    assert jnp.allclose(out, ref, atol=1e-2, rtol=1e-2), (
        float(jnp.max(jnp.abs(out - ref))))

    # 2) Per-layer tiled fallback path (exercised explicitly for coverage).
    model_fb = MLPPallas(layer_dims, init_scale=1.0, key=k_w, force_fallback=True)
    out_fb = jax.block_until_ready(model_fb(x))
    assert out_fb.shape == (8, layer_dims[-1])
    ref_fb = reference(model_fb, x)
    assert jnp.allclose(out_fb, ref_fb, atol=1e-2, rtol=1e-2), (
        float(jnp.max(jnp.abs(out_fb - ref_fb))))

    print("KERNEL_OK")
</pallas_src>

<mosaic_0001>
module attributes {stable_mosaic.version = 11 : i64} {
  func.func @_mlp_fused_kernel(%arg0: i32, %arg1: memref<8x256xbf16, #tpu.memory_space<vmem>>, %arg2: memref<256x128xbf16, #tpu.memory_space<vmem>>, %arg3: memref<128x128xbf16, #tpu.memory_space<vmem>>, %arg4: memref<8x128xf32, #tpu.memory_space<vmem>>) attributes {dimension_semantics = [#tpu.dimension_semantics<parallel>], iteration_bounds = array<i64: 1>, scalar_prefetch = 0 : i64, scratch_operands = 0 : i64, tpu.core_type = #tpu.core_type<tc>, window_params = [{transform_indices = @transform_0, window_bounds = array<i64: 8, 256>}, {pipeline_mode = #tpu.pipeline_mode<synchronous>, transform_indices = @transform_1, window_bounds = array<i64: 256, 128>}, {pipeline_mode = #tpu.pipeline_mode<synchronous>, transform_indices = @transform_2, window_bounds = array<i64: 128, 128>}, {transform_indices = @transform_3, window_bounds = array<i64: 8, 128>}]} {
    %c0 = arith.constant 0 : index
    %c0_0 = arith.constant 0 : index
    %0 = vector.load %arg1[%c0, %c0_0] : memref<8x256xbf16, #tpu.memory_space<vmem>>, vector<8x256xbf16>
    %c0_1 = arith.constant 0 : index
    %c0_2 = arith.constant 0 : index
    %1 = vector.load %arg2[%c0_1, %c0_2] : memref<256x128xbf16, #tpu.memory_space<vmem>>, vector<256x128xbf16>
    %cst = arith.constant dense<0.000000e+00> : vector<8x128xf32>
    %2 = tpu.matmul %0, %1, %cst {dimension_numbers = #tpu.dot_dimension_numbers<[1], [0], [0], [1], [0, 0, 1, 1], [], []>} : vector<8x256xbf16>, vector<256x128xbf16>, vector<8x128xf32> -> vector<8x128xf32>
    %cst_3 = arith.constant 0.000000e+00 : f32
    %3 = vector.broadcast %cst_3 : f32 to vector<8x128xf32>
    %4 = arith.maximumf %2, %3 : vector<8x128xf32>
    %5 = arith.truncf %4 : vector<8x128xf32> to vector<8x128xbf16>
    %c0_4 = arith.constant 0 : index
    %c0_5 = arith.constant 0 : index
    %6 = vector.load %arg3[%c0_4, %c0_5] : memref<128x128xbf16, #tpu.memory_space<vmem>>, vector<128x128xbf16>
    %cst_6 = arith.constant dense<0.000000e+00> : vector<8x128xf32>
    %7 = tpu.matmul %5, %6, %cst_6 {dimension_numbers = #tpu.dot_dimension_numbers<[1], [0], [0], [1], [0, 0, 1, 1], [], []>} : vector<8x128xbf16>, vector<128x128xbf16>, vector<8x128xf32> -> vector<8x128xf32>
    %c0_7 = arith.constant 0 : index
    %c0_8 = arith.constant 0 : index
    %8 = vector.load %arg4[%c0_7, %c0_8] : memref<8x128xf32, #tpu.memory_space<vmem>>, vector<8x128xf32>
    tpu.vector_store %arg4[%c0_7, %c0_8], %7 {strides = array<i32>} : memref<8x128xf32, #tpu.memory_space<vmem>>, vector<8x128xf32>,
    return
  }
  func.func @transform_0(%arg0: i32) -> (i32, i32) {
    %c0_i32 = arith.constant 0 : i32
    %c0_i32_0 = arith.constant 0 : i32
    return %arg0, %c0_i32 : i32, i32
  }
  func.func @transform_1(%arg0: i32) -> (i32, i32) {
    %c0_i32 = arith.constant 0 : i32
    %c0_i32_0 = arith.constant 0 : i32
    %c0_i32_1 = arith.constant 0 : i32
    return %c0_i32, %c0_i32_0 : i32, i32
  }
  func.func @transform_2(%arg0: i32) -> (i32, i32) {
    %c0_i32 = arith.constant 0 : i32
    %c0_i32_0 = arith.constant 0 : i32
    %c0_i32_1 = arith.constant 0 : i32
    return %c0_i32, %c0_i32_0 : i32, i32
  }
  func.func @transform_3(%arg0: i32) -> (i32, i32) {
    %c0_i32 = arith.constant 0 : i32
    %c0_i32_0 = arith.constant 0 : i32
    return %arg0, %c0_i32 : i32, i32
  }
}

module attributes {stable_mosaic.version = 11 : i64} {
  func.func @_mlp_fused_kernel(%arg0: i32, %arg1: memref<8x256xbf16, #tpu.memory_space<vmem>>, %arg2: memref<256x128xbf16, #tpu.memory_space<vmem>>, %arg3: memref<128x128xbf16, #tpu.memory_space<vmem>>, %arg4: memref<8x128xf32, #tpu.memory_space<vmem>>) attributes {dimension_semantics = [#tpu.dimension_semantics<parallel>], iteration_bounds = array<i64: 1>, scalar_prefetch = 0 : i64, scratch_operands = 0 : i64, tpu.core_type = #tpu.core_type<tc>, window_params = [{transform_indices = @transform_0, window_bounds = array<i64: 8, 256>}, {pipeline_mode = #tpu.pipeline_mode<synchronous>, transform_indices = @transform_1, window_bounds = array<i64: 256, 128>}, {pipeline_mode = #tpu.pipeline_mode<synchronous>, transform_indices = @transform_2, window_bounds = array<i64: 128, 128>}, {transform_indices = @transform_3, window_bounds = array<i64: 8, 128>}]} {
    %c0 = arith.constant 0 : index
    %c0_0 = arith.constant 0 : index
    %0 = vector.load %arg1[%c0, %c0_0] : memref<8x256xbf16, #tpu.memory_space<vmem>>, vector<8x256xbf16>
    %c0_1 = arith.constant 0 : index
    %c0_2 = arith.constant 0 : index
    %1 = vector.load %arg2[%c0_1, %c0_2] : memref<256x128xbf16, #tpu.memory_space<vmem>>, vector<256x128xbf16>
    %cst = arith.constant dense<0.000000e+00> : vector<8x128xf32>
    %2 = tpu.matmul %0, %1, %cst {dimension_numbers = #tpu.dot_dimension_numbers<[1], [0], [0], [1], [0, 0, 1, 1], [], []>} : vector<8x256xbf16>, vector<256x128xbf16>, vector<8x128xf32> -> vector<8x128xf32>
    %cst_3 = arith.constant 0.000000e+00 : f32
    %3 = vector.broadcast %cst_3 : f32 to vector<8x128xf32>
    %4 = arith.maximumf %2, %3 : vector<8x128xf32>
    %5 = arith.truncf %4 : vector<8x128xf32> to vector<8x128xbf16>
    %c0_4 = arith.constant 0 : index
    %c0_5 = arith.constant 0 : index
    %6 = vector.load %arg3[%c0_4, %c0_5] : memref<128x128xbf16, #tpu.memory_space<vmem>>, vector<128x128xbf16>
    %cst_6 = arith.constant dense<0.000000e+00> : vector<8x128xf32>
    %7 = tpu.matmul %5, %6, %cst_6 {dimension_numbers = #tpu.dot_dimension_numbers<[1], [0], [0], [1], [0, 0, 1, 1], [], []>} : vector<8x128xbf16>, vector<128x128xbf16>, vector<8x128xf32> -> vector<8x128xf32>
    %c0_7 = arith.constant 0 : index
    %c0_8 = arith.constant 0 : index
    %8 = vector.load %arg4[%c0_7, %c0_8] : memref<8x128xf32, #tpu.memory_space<vmem>>, vector<8x128xf32>
    tpu.vector_store %arg4[%c0_7, %c0_8], %7 {strides = array<i32>} : memref<8x128xf32, #tpu.memory_space<vmem>>, vector<8x128xf32>,
    return
  }
  func.func @transform_0(%arg0: i32) -> (i32, i32) {
    %c0_i32 = arith.constant 0 : i32
    %c0_i32_0 = arith.constant 0 : i32
    return %arg0, %c0_i32 : i32, i32
  }
  func.func @transform_1(%arg0: i32) -> (i32, i32) {
    %c0_i32 = arith.constant 0 : i32
    %c0_i32_0 = arith.constant 0 : i32
    %c0_i32_1 = arith.constant 0 : i32
    return %c0_i32, %c0_i32_0 : i32, i32
  }
  func.func @transform_2(%arg0: i32) -> (i32, i32) {
    %c0_i32 = arith.constant 0 : i32
    %c0_i32_0 = arith.constant 0 : i32
    %c0_i32_1 = arith.constant 0 : i32
    return %c0_i32, %c0_i32_0 : i32, i32
  }
  func.func @transform_3(%arg0: i32) -> (i32, i32) {
    %c0_i32 = arith.constant 0 : i32
    %c0_i32_0 = arith.constant 0 : i32
    return %arg0, %c0_i32 : i32, i32
  }
}

</mosaic_0001>

<llo_original>
// kernel: tpu_custom_call.1
$region0: #{tpu_custom_call.1}
  #allocation0 [shape = 'u32[]', space=smem, size = 0x4, offset = 0x4, fixed_abs, tag = 'smem constant byte address 0x4 - core index']
  #allocation1 [shape = 'u32[72,128]{1,0:T(1,128)}', space=vmem, size = 0x9000, scoped, tag = 'internal scratch']
  %s0 = inlined_call_operand.hbm [shape: bf16[8,256], index: 0, kind: input, shape index: {}]
  %s1 = inlined_call_operand.hbm [shape: bf16[256,128], index: 1, kind: input, shape index: {}]
  %s2 = inlined_call_operand.hbm [shape: bf16[128,128], index: 2, kind: input, shape index: {}]
  %s3 = inlined_call_operand.hbm [shape: f32[8,128], index: 3, kind: output, shape index: {}]
  %s4 = sld [smem:[#allocation0]]
  $region34: #{tpu_custom_call.1} parent=0
    _
  %s6 = ssub.s32 1, %s4
  %s7 = scalar_select 0, %s6, %s4
  $region1: #{tpu_custom_call.1} parent=0
    #allocation2 [shape = 'u8[4096]{0}', space=vmem, size = 0x1000, scoped, tag = 'input window, operand 0, single buffered']
    #allocation3 [shape = 's32[1]{0}', space=sflag, size = 0x4, scoped, tag = 'scoped memory for tpu_custom_call.1']
    #allocation4 [shape = 's32[1]{0}', space=sflag, size = 0x4, scoped, tag = 'scoped memory for tpu_custom_call.1']
    #allocation5 [shape = 'u8[65536]{0}', space=vmem, size = 0x10000, scoped, tag = 'input window, operand 1, single buffered']
    #allocation6 [shape = 's32[1]{0}', space=sflag, size = 0x4, scoped, tag = 'scoped memory for tpu_custom_call.1']
    #allocation7 [shape = 'u8[32768]{0}', space=vmem, size = 0x8000, scoped, tag = 'input window, operand 2, single buffered']
    #allocation8 [shape = 'u8[4096]{0}', space=vmem, size = 0x1000, scoped, tag = 'output window, operand 0, single buffered']
    %8 = vsyncpa [#allocation3], 0
    %9 = vsyncpa [#allocation6], 0
    %10 = vsyncpa [#allocation4], 0
    // Predicated region
    $region2: #{tpu_custom_call.1} parent=1 // pred_check
      _
    $region3: #{tpu_custom_call.1} parent=1 // pred_check_branch
      %12 = sbr.rel (0) target = $region5
    $region4: #{tpu_custom_call.1} parent=1 // pred_region
      %14 = vsyncadd [#allocation3], 0
      %s16 = sshll.u32 %s0, 4
      %s17 = int_to_ptr.hbm [resolvable:$true] %s16
      %s18 = sshll.u32 [#allocation2], 4
      %s19 = int_to_ptr.vmem [resolvable:$true] %s18
      %21 = dma.hbm_to_vmem [thread:$0]  %s17, 128, %s19, [#allocation3]
    $region5: #{tpu_custom_call.1} parent=1 // pred_fallthru
      _
    // Predicated region
    $region6: #{tpu_custom_call.1} parent=1 // pred_check
      _
    $region7: #{tpu_custom_call.1} parent=1 // pred_check_branch
      %23 = sbr.rel (0) target = $region9
    $region8: #{tpu_custom_call.1} parent=1 // pred_region
      %25 = vsyncadd [#allocation6], 0
      %s26 = sshll.u32 %s1, 4
      %s27 = int_to_ptr.hbm [resolvable:$true] %s26
      %s28 = sshll.u32 [#allocation5], 4
      %s29 = int_to_ptr.vmem [resolvable:$true] %s28
      %34 = dma.hbm_to_vmem [thread:$0]  %s27, 2048, %s29, [#allocation6], 64, 64, 4
    $region9: #{tpu_custom_call.1} parent=1 // pred_fallthru
      _
    // Predicated region
    $region10: #{tpu_custom_call.1} parent=1 // pred_check
      _
    $region11: #{tpu_custom_call.1} parent=1 // pred_check_branch
      %36 = sbr.rel (0) target = $region13
    $region12: #{tpu_custom_call.1} parent=1 // pred_region
      %38 = vsyncadd [#allocation6], 0
      %s39 = sshll.u32 %s2, 4
      %s40 = int_to_ptr.hbm [resolvable:$true] %s39
      %s41 = sshll.u32 [#allocation7], 4
      %s42 = int_to_ptr.vmem [resolvable:$true] %s41
      %47 = dma.hbm_to_vmem [thread:$0]  %s40, 1024, %s42, [#allocation6], 64, 64, 4
    $region13: #{tpu_custom_call.1} parent=1 // pred_fallthru
      _
    // Predicated region
    $region14: #{tpu_custom_call.1} parent=1 // pred_check
      _
    $region15: #{tpu_custom_call.1} parent=1 // pred_check_branch
      %49 = sbr.rel (0) target = $region17
    $region16: #{tpu_custom_call.1} parent=1 // pred_region
      %51 = dma.done [#allocation3], 128
    $region17: #{tpu_custom_call.1} parent=1 // pred_fallthru
      _
    // Predicated region
    $region18: #{tpu_custom_call.1} parent=1 // pred_check
      _
    $region19: #{tpu_custom_call.1} parent=1 // pred_check_branch
      %53 = sbr.rel (0) target = $region21
    $region20: #{tpu_custom_call.1} parent=1 // pred_region
      %55 = dma.done [#allocation6], 2048
    $region21: #{tpu_custom_call.1} parent=1 // pred_fallthru
      _
    // Predicated region
    $region22: #{tpu_custom_call.1} parent=1 // pred_check
      _
    $region23: #{tpu_custom_call.1} parent=1 // pred_check_branch
      %57 = sbr.rel (0) target = $region25
    $region24: #{tpu_custom_call.1} parent=1 // pred_region
      %59 = dma.done [#allocation6], 1024
    $region25: #{tpu_custom_call.1} parent=1 // pred_fallthru
      _
    %v60 = vld [vmem:[#allocation2] sm:$0xff]
    %v61 = vld [vmem:[#allocation5] sm:$0xf]
    %v62 = vld [vmem:[#allocation5 + $0x4] sm:$0xf]
    %v63 = vld [vmem:[#allocation5 + $0x8] sm:$0xf]
    %v64 = vld [vmem:[#allocation5 + $0xc] sm:$0xf]
    %v65 = vld [vmem:[#allocation5 + $0x10] sm:$0xf]
    %v66 = vld [vmem:[#allocation5 + $0x14] sm:$0xf]
    %v67 = vld [vmem:[#allocation5 + $0x18] sm:$0xf]
    %v68 = vld [vmem:[#allocation5 + $0x1c] sm:$0xf]
    %v69 = vld [vmem:[#allocation5 + $0x20] sm:$0xf]
    %v70 = vld [vmem:[#allocation5 + $0x24] sm:$0xf]
    %v71 = vld [vmem:[#allocation5 + $0x28] sm:$0xf]
    %v72 = vld [vmem:[#allocation5 + $0x2c] sm:$0xf]
    %v73 = vld [vmem:[#allocation5 + $0x30] sm:$0xf]
    %v74 = vld [vmem:[#allocation5 + $0x34] sm:$0xf]
    %v75 = vld [vmem:[#allocation5 + $0x38] sm:$0xf]
    %v76 = vld [vmem:[#allocation5 + $0x3c] sm:$0xf]
    %v77 = vld [vmem:[#allocation5 + $0x40] sm:$0xf]
    %v78 = vld [vmem:[#allocation5 + $0x44] sm:$0xf]
    %v79 = vld [vmem:[#allocation5 + $0x48] sm:$0xf]
    %v80 = vld [vmem:[#allocation5 + $0x4c] sm:$0xf]
    %v81 = vld [vmem:[#allocation5 + $0x50] sm:$0xf]
    %v82 = vld [vmem:[#allocation5 + $0x54] sm:$0xf]
    %v83 = vld [vmem:[#allocation5 + $0x58] sm:$0xf]
    %v84 = vld [vmem:[#allocation5 + $0x5c] sm:$0xf]
    %v85 = vld [vmem:[#allocation5 + $0x60] sm:$0xf]
    %v86 = vld [vmem:[#allocation5 + $0x64] sm:$0xf]
    %v87 = vld [vmem:[#allocation5 + $0x68] sm:$0xf]
    %v88 = vld [vmem:[#allocation5 + $0x6c] sm:$0xf]
    %v89 = vld [vmem:[#allocation5 + $0x70] sm:$0xf]
    %v90 = vld [vmem:[#allocation5 + $0x74] sm:$0xf]
    %v91 = vld [vmem:[#allocation5 + $0x78] sm:$0xf]
    %v92 = vld [vmem:[#allocation5 + $0x7c] sm:$0xf]
    %v94 = vunpack.c.l.b16 %v60
    %v95 = vunpack.c.h.b16 %v60
    %v96 = vpack.c.b16 %v94, %v94
    %v97 = vpack.c.b16 %v95, %v95
    %v132 = vunpack.c.l.b16 %v61
    %v133 = vunpack.c.l.b16 %v62
    %v134 = vunpack.c.l.b16 %v63
    %v135 = vunpack.c.l.b16 %v64
    %v136 = vunpack.c.l.b16 %v65
    %v137 = vunpack.c.l.b16 %v66
    %v138 = vunpack.c.l.b16 %v67
    %v139 = vunpack.c.l.b16 %v68
    %v140 = vunpack.c.l.b16 %v69
    %v141 = vunpack.c.l.b16 %v70
    %v142 = vunpack.c.l.b16 %v71
    %v143 = vunpack.c.l.b16 %v72
    %v144 = vunpack.c.l.b16 %v73
    %v145 = vunpack.c.l.b16 %v74
    %v146 = vunpack.c.l.b16 %v75
    %v147 = vunpack.c.l.b16 %v76
    %v148 = vunpack.c.l.b16 %v77
    %v149 = vunpack.c.l.b16 %v78
    %v150 = vunpack.c.l.b16 %v79
    %v151 = vunpack.c.l.b16 %v80
    %v152 = vunpack.c.l.b16 %v81
    %v153 = vunpack.c.l.b16 %v82
    %v154 = vunpack.c.l.b16 %v83
    %v155 = vunpack.c.l.b16 %v84
    %v156 = vunpack.c.l.b16 %v85
    %v157 = vunpack.c.l.b16 %v86
    %v158 = vunpack.c.l.b16 %v87
    %v159 = vunpack.c.l.b16 %v88
    %v160 = vunpack.c.l.b16 %v89
    %v161 = vunpack.c.l.b16 %v90
    %v162 = vunpack.c.l.b16 %v91
    %v163 = vunpack.c.l.b16 %v92
    %v164 = vpack.c.b16 %v133, %v132
    %v165 = vpack.c.b16 %v135, %v134
    %v166 = vpack.c.b16 %v137, %v136
    %v167 = vpack.c.b16 %v139, %v138
    %v168 = vpack.c.b16 %v141, %v140
    %v169 = vpack.c.b16 %v143, %v142
    %v170 = vpack.c.b16 %v145, %v144
    %v171 = vpack.c.b16 %v147, %v146
    %v172 = vpack.c.b16 %v149, %v148
    %v173 = vpack.c.b16 %v151, %v150
    %v174 = vpack.c.b16 %v153, %v152
    %v175 = vpack.c.b16 %v155, %v154
    %v176 = vpack.c.b16 %v157, %v156
    %v177 = vpack.c.b16 %v159, %v158
    %v178 = vpack.c.b16 %v161, %v160
    %v179 = vpack.c.b16 %v163, %v162
    %196 = vmatpush.bf16.msra.mxu0 %v171
    %197 = vmatpush.bf16.msra.mxu0 %v170
    %198 = vmatpush.bf16.msra.mxu0 %v169
    %199 = vmatpush.bf16.msra.mxu0 %v168
    %200 = vmatpush.bf16.msra.mxu0 %v167
    %201 = vmatpush.bf16.msra.mxu0 %v166
    %202 = vmatpush.bf16.msra.mxu0 %v165
    %203 = vmatpush.bf16.msra.mxu0 %v164
    %204 = vmatmul.bf16.gmra.mxu0 %v96
    %v205 = vpop.f32.mrf.mxu0
    %v206 = vadd.f32 0.0, %v205
    %v207 = vpop.f32.mrf.mxu0
    %208 = vdwg.mxu0
    %209 = vmatpush.bf16.msra.mxu0 %v179
    %210 = vmatpush.bf16.msra.mxu0 %v178
    %211 = vmatpush.bf16.msra.mxu0 %v177
    %212 = vmatpush.bf16.msra.mxu0 %v176
    %213 = vmatpush.bf16.msra.mxu0 %v175
    %214 = vmatpush.bf16.msra.mxu0 %v174
    %215 = vmatpush.bf16.msra.mxu0 %v173
    %216 = vmatpush.bf16.msra.mxu0 %v172
    %217 = vmatmul.bf16.gmra.mxu0 %v97
    %v218 = vpop.f32.mrf.mxu0
    %v219 = vadd.f32 %v206, %v218
    %v220 = vpop.f32.mrf.mxu0
    %221 = vdwg.mxu0
    %v222 = vmax.f32 %v219, 0.0
    %v223 = vpack.c.bf16 %v222, %v222
    %v224 = vld [vmem:[#allocation7] sm:$0xf]
    %v225 = vld [vmem:[#allocation7 + $0x4] sm:$0xf]
    %v226 = vld [vmem:[#allocation7 + $0x8] sm:$0xf]
    %v227 = vld [vmem:[#allocation7 + $0xc] sm:$0xf]
    %v228 = vld [vmem:[#allocation7 + $0x10] sm:$0xf]
    %v229 = vld [vmem:[#allocation7 + $0x14] sm:$0xf]
    %v230 = vld [vmem:[#allocation7 + $0x18] sm:$0xf]
    %v231 = vld [vmem:[#allocation7 + $0x1c] sm:$0xf]
    %v232 = vld [vmem:[#allocation7 + $0x20] sm:$0xf]
    %v233 = vld [vmem:[#allocation7 + $0x24] sm:$0xf]
    %v234 = vld [vmem:[#allocation7 + $0x28] sm:$0xf]
    %v235 = vld [vmem:[#allocation7 + $0x2c] sm:$0xf]
    %v236 = vld [vmem:[#allocation7 + $0x30] sm:$0xf]
    %v237 = vld [vmem:[#allocation7 + $0x34] sm:$0xf]
    %v238 = vld [vmem:[#allocation7 + $0x38] sm:$0xf]
    %v239 = vld [vmem:[#allocation7 + $0x3c] sm:$0xf]
    %v256 = vunpack.c.l.b16 %v224
    %v257 = vunpack.c.l.b16 %v225
    %v258 = vunpack.c.l.b16 %v226
    %v259 = vunpack.c.l.b16 %v227
    %v260 = vunpack.c.l.b16 %v228
    %v261 = vunpack.c.l.b16 %v229
    %v262 = vunpack.c.l.b16 %v230
    %v263 = vunpack.c.l.b16 %v231
    %v264 = vunpack.c.l.b16 %v232
    %v265 = vunpack.c.l.b16 %v233
    %v266 = vunpack.c.l.b16 %v234
    %v267 = vunpack.c.l.b16 %v235
    %v268 = vunpack.c.l.b16 %v236
    %v269 = vunpack.c.l.b16 %v237
    %v270 = vunpack.c.l.b16 %v238
    %v271 = vunpack.c.l.b16 %v239
    %v272 = vpack.c.b16 %v257, %v256
    %v273 = vpack.c.b16 %v259, %v258
    %v274 = vpack.c.b16 %v261, %v260
    %v275 = vpack.c.b16 %v263, %v262
    %v276 = vpack.c.b16 %v265, %v264
    %v277 = vpack.c.b16 %v267, %v266
    %v278 = vpack.c.b16 %v269, %v268
    %v279 = vpack.c.b16 %v271, %v270
    %288 = vmatpush.bf16.msra.mxu0 %v279
    %289 = vmatpush.bf16.msra.mxu0 %v278
    %290 = vmatpush.bf16.msra.mxu0 %v277
    %291 = vmatpush.bf16.msra.mxu0 %v276
    %292 = vmatpush.bf16.msra.mxu0 %v275
    %293 = vmatpush.bf16.msra.mxu0 %v274
    %294 = vmatpush.bf16.msra.mxu0 %v273
    %295 = vmatpush.bf16.msra.mxu0 %v272
    %296 = vmatmul.bf16.gmra.mxu0 %v223
    %v297 = vpop.f32.mrf.mxu0
    %v298 = vadd.f32 0.0, %v297
    %v299 = vpop.f32.mrf.mxu0
    %300 = vdwg.mxu0
    %301 = vst [vmem:[#allocation8] sm:$0xff] %v298
    // Predicated region
    $region26: #{tpu_custom_call.1} parent=1 // pred_check
      _
    $region27: #{tpu_custom_call.1} parent=1 // pred_check_branch
      %303 = sbr.rel (0) target = $region29
    $region28: #{tpu_custom_call.1} parent=1 // pred_region
      %305 = vsyncadd [#allocation4], 0
      %s307 = sshll.u32 [#allocation8], 4
      %s308 = int_to_ptr.vmem [resolvable:$true] %s307
      %s309 = sshll.u32 %s3, 4
      %s310 = int_to_ptr.hbm [resolvable:$true] %s309
      %312 = dma.vmem_to_hbm [thread:$0]  %s308, 128, %s310, [#allocation4]
    $region29: #{tpu_custom_call.1} parent=1 // pred_fallthru
      _
    // Predicated region
    $region30: #{tpu_custom_call.1} parent=1 // pred_check
      _
    $region31: #{tpu_custom_call.1} parent=1 // pred_check_branch
      %314 = sbr.rel (0) target = $region33
    $region32: #{tpu_custom_call.1} parent=1 // pred_region
      %316 = dma.done [#allocation4], 128
    $region33: #{tpu_custom_call.1} parent=1 // pred_fallthru
      _
    %317 = vsyncpa [#allocation3], 1
    %318 = vsyncpa [#allocation6], 1
    %319 = vsyncpa [#allocation4], 1

// kernel: tpu_custom_call.1
$region0: #{tpu_custom_call.1}
  #allocation0 [shape = 'u32[]', space=smem, size = 0x4, offset = 0x4, fixed_abs, tag = 'smem constant byte address 0x4 - core index']
  #allocation1 [shape = 'u32[72,128]{1,0:T(1,128)}', space=vmem, size = 0x9000, scoped, tag = 'internal scratch']
  %s0 = inlined_call_operand.hbm [shape: bf16[8,256], index: 0, kind: input, shape index: {}]
  %s1 = inlined_call_operand.hbm [shape: bf16[256,128], index: 1, kind: input, shape index: {}]
  %s2 = inlined_call_operand.hbm [shape: bf16[128,128], index: 2, kind: input, shape index: {}]
  %s3 = inlined_call_operand.hbm [shape: f32[8,128], index: 3, kind: output, shape index: {}]
  %s4 = sld [smem:[#allocation0]]
  $region34: #{tpu_custom_call.1} parent=0
    _
  %s6 = ssub.s32 1, %s4
  %s7 = scalar_select 0, %s6, %s4
  $region1: #{tpu_custom_call.1} parent=0
    #allocation2 [shape = 'u8[4096]{0}', space=vmem, size = 0x1000, scoped, tag = 'input window, operand 0, single buffered']
    #allocation3 [shape = 's32[1]{0}', space=sflag, size = 0x4, scoped, tag = 'scoped memory for tpu_custom_call.1']
    #allocation4 [shape = 's32[1]{0}', space=sflag, size = 0x4, scoped, tag = 'scoped memory for tpu_custom_call.1']
    #allocation5 [shape = 'u8[65536]{0}', space=vmem, size = 0x10000, scoped, tag = 'input window, operand 1, single buffered']
    #allocation6 [shape = 's32[1]{0}', space=sflag, size = 0x4, scoped, tag = 'scoped memory for tpu_custom_call.1']
    #allocation7 [shape = 'u8[32768]{0}', space=vmem, size = 0x8000, scoped, tag = 'input window, operand 2, single buffered']
    #allocation8 [shape = 'u8[4096]{0}', space=vmem, size = 0x1000, scoped, tag = 'output window, operand 0, single buffered']
    %8 = vsyncpa [#allocation3], 0
    %9 = vsyncpa [#allocation6], 0
    %10 = vsyncpa [#allocation4], 0
    // Predicated region
    $region2: #{tpu_custom_call.1} parent=1 // pred_check
      _
    $region3: #{tpu_custom_call.1} parent=1 // pred_check_branch
      %12 = sbr.rel (0) target = $region5
    $region4: #{tpu_custom_call.1} parent=1 // pred_region
      %14 = vsyncadd [#allocation3], 0
      %s16 = sshll.u32 %s0, 4
      %s17 = int_to_ptr.hbm [resolvable:$true] %s16
      %s18 = sshll.u32 [#allocation2], 4
      %s19 = int_to_ptr.vmem [resolvable:$true] %s18
      %21 = dma.hbm_to_vmem [thread:$0]  %s17, 128, %s19, [#allocation3]
    $region5: #{tpu_custom_call.1} parent=1 // pred_fallthru
      _
    // Predicated region
    $region6: #{tpu_custom_call.1} parent=1 // pred_check
      _
    $region7: #{tpu_custom_call.1} parent=1 // pred_check_branch
      %23 = sbr.rel (0) target = $region9
    $region8: #{tpu_custom_call.1} parent=1 // pred_region
      %25 = vsyncadd [#allocation6], 0
      %s26 = sshll.u32 %s1, 4
      %s27 = int_to_ptr.hbm [resolvable:$true] %s26
      %s28 = sshll.u32 [#allocation5], 4
      %s29 = int_to_ptr.vmem [resolvable:$true] %s28
      %34 = dma.hbm_to_vmem [thread:$0]  %s27, 2048, %s29, [#allocation6], 64, 64, 4
    $region9: #{tpu_custom_call.1} parent=1 // pred_fallthru
      _
    // Predicated region
    $region10: #{tpu_custom_call.1} parent=1 // pred_check
      _
    $region11: #{tpu_custom_call.1} parent=1 // pred_check_branch
      %36 = sbr.rel (0) target = $region13
    $region12: #{tpu_custom_call.1} parent=1 // pred_region
      %38 = vsyncadd [#allocation6], 0
      %s39 = sshll.u32 %s2, 4
      %s40 = int_to_ptr.hbm [resolvable:$true] %s39
      %s41 = sshll.u32 [#allocation7], 4
      %s42 = int_to_ptr.vmem [resolvable:$true] %s41
      %47 = dma.hbm_to_vmem [thread:$0]  %s40, 1024, %s42, [#allocation6], 64, 64, 4
    $region13: #{tpu_custom_call.1} parent=1 // pred_fallthru
      _
    // Predicated region
    $region14: #{tpu_custom_call.1} parent=1 // pred_check
      _
    $region15: #{tpu_custom_call.1} parent=1 // pred_check_branch
      %49 = sbr.rel (0) target = $region17
    $region16: #{tpu_custom_call.1} parent=1 // pred_region
      %51 = dma.done [#allocation3], 128
    $region17: #{tpu_custom_call.1} parent=1 // pred_fallthru
      _
    // Predicated region
    $region18: #{tpu_custom_call.1} parent=1 // pred_check
      _
    $region19: #{tpu_custom_call.1} parent=1 // pred_check_branch
      %53 = sbr.rel (0) target = $region21
    $region20: #{tpu_custom_call.1} parent=1 // pred_region
      %55 = dma.done [#allocation6], 2048
    $region21: #{tpu_custom_call.1} parent=1 // pred_fallthru
      _
    // Predicated region
    $region22: #{tpu_custom_call.1} parent=1 // pred_check
      _
    $region23: #{tpu_custom_call.1} parent=1 // pred_check_branch
      %57 = sbr.rel (0) target = $region25
    $region24: #{tpu_custom_call.1} parent=1 // pred_region
      %59 = dma.done [#allocation6], 1024
    $region25: #{tpu_custom_call.1} parent=1 // pred_fallthru
      _
    %v60 = vld [vmem:[#allocation2] sm:$0xff]
    %v61 = vld [vmem:[#allocation5] sm:$0xf]
    %v62 = vld [vmem:[#allocation5 + $0x4] sm:$0xf]
    %v63 = vld [vmem:[#allocation5 + $0x8] sm:$0xf]
    %v64 = vld [vmem:[#allocation5 + $0xc] sm:$0xf]
    %v65 = vld [vmem:[#allocation5 + $0x10] sm:$0xf]
    %v66 = vld [vmem:[#allocation5 + $0x14] sm:$0xf]
    %v67 = vld [vmem:[#allocation5 + $0x18] sm:$0xf]
    %v68 = vld [vmem:[#allocation5 + $0x1c] sm:$0xf]
    %v69 = vld [vmem:[#allocation5 + $0x20] sm:$0xf]
    %v70 = vld [vmem:[#allocation5 + $0x24] sm:$0xf]
    %v71 = vld [vmem:[#allocation5 + $0x28] sm:$0xf]
    %v72 = vld [vmem:[#allocation5 + $0x2c] sm:$0xf]
    %v73 = vld [vmem:[#allocation5 + $0x30] sm:$0xf]
    %v74 = vld [vmem:[#allocation5 + $0x34] sm:$0xf]
    %v75 = vld [vmem:[#allocation5 + $0x38] sm:$0xf]
    %v76 = vld [vmem:[#allocation5 + $0x3c] sm:$0xf]
    %v77 = vld [vmem:[#allocation5 + $0x40] sm:$0xf]
    %v78 = vld [vmem:[#allocation5 + $0x44] sm:$0xf]
    %v79 = vld [vmem:[#allocation5 + $0x48] sm:$0xf]
    %v80 = vld [vmem:[#allocation5 + $0x4c] sm:$0xf]
    %v81 = vld [vmem:[#allocation5 + $0x50] sm:$0xf]
    %v82 = vld [vmem:[#allocation5 + $0x54] sm:$0xf]
    %v83 = vld [vmem:[#allocation5 + $0x58] sm:$0xf]
    %v84 = vld [vmem:[#allocation5 + $0x5c] sm:$0xf]
    %v85 = vld [vmem:[#allocation5 + $0x60] sm:$0xf]
    %v86 = vld [vmem:[#allocation5 + $0x64] sm:$0xf]
    %v87 = vld [vmem:[#allocation5 + $0x68] sm:$0xf]
    %v88 = vld [vmem:[#allocation5 + $0x6c] sm:$0xf]
    %v89 = vld [vmem:[#allocation5 + $0x70] sm:$0xf]
    %v90 = vld [vmem:[#allocation5 + $0x74] sm:$0xf]
    %v91 = vld [vmem:[#allocation5 + $0x78] sm:$0xf]
    %v92 = vld [vmem:[#allocation5 + $0x7c] sm:$0xf]
    %v94 = vunpack.c.l.b16 %v60
    %v95 = vunpack.c.h.b16 %v60
    %v96 = vpack.c.b16 %v94, %v94
    %v97 = vpack.c.b16 %v95, %v95
    %v132 = vunpack.c.l.b16 %v61
    %v133 = vunpack.c.l.b16 %v62
    %v134 = vunpack.c.l.b16 %v63
    %v135 = vunpack.c.l.b16 %v64
    %v136 = vunpack.c.l.b16 %v65
    %v137 = vunpack.c.l.b16 %v66
    %v138 = vunpack.c.l.b16 %v67
    %v139 = vunpack.c.l.b16 %v68
    %v140 = vunpack.c.l.b16 %v69
    %v141 = vunpack.c.l.b16 %v70
    %v142 = vunpack.c.l.b16 %v71
    %v143 = vunpack.c.l.b16 %v72
    %v144 = vunpack.c.l.b16 %v73
    %v145 = vunpack.c.l.b16 %v74
    %v146 = vunpack.c.l.b16 %v75
    %v147 = vunpack.c.l.b16 %v76
    %v148 = vunpack.c.l.b16 %v77
    %v149 = vunpack.c.l.b16 %v78
    %v150 = vunpack.c.l.b16 %v79
    %v151 = vunpack.c.l.b16 %v80
    %v152 = vunpack.c.l.b16 %v81
    %v153 = vunpack.c.l.b16 %v82
    %v154 = vunpack.c.l.b16 %v83
    %v155 = vunpack.c.l.b16 %v84
    %v156 = vunpack.c.l.b16 %v85
    %v157 = vunpack.c.l.b16 %v86
    %v158 = vunpack.c.l.b16 %v87
    %v159 = vunpack.c.l.b16 %v88
    %v160 = vunpack.c.l.b16 %v89
    %v161 = vunpack.c.l.b16 %v90
    %v162 = vunpack.c.l.b16 %v91
    %v163 = vunpack.c.l.b16 %v92
    %v164 = vpack.c.b16 %v133, %v132
    %v165 = vpack.c.b16 %v135, %v134
    %v166 = vpack.c.b16 %v137, %v136
    %v167 = vpack.c.b16 %v139, %v138
    %v168 = vpack.c.b16 %v141, %v140
    %v169 = vpack.c.b16 %v143, %v142
    %v170 = vpack.c.b16 %v145, %v144
    %v171 = vpack.c.b16 %v147, %v146
    %v172 = vpack.c.b16 %v149, %v148
    %v173 = vpack.c.b16 %v151, %v150
    %v174 = vpack.c.b16 %v153, %v152
    %v175 = vpack.c.b16 %v155, %v154
    %v176 = vpack.c.b16 %v157, %v156
    %v177 = vpack.c.b16 %v159, %v158
    %v178 = vpack.c.b16 %v161, %v160
    %v179 = vpack.c.b16 %v163, %v162
    %196 = vmatpush.bf16.msra.mxu0 %v171
    %197 = vmatpush.bf16.msra.mxu0 %v170
    %198 = vmatpush.bf16.msra.mxu0 %v169
    %199 = vmatpush.bf16.msra.mxu0 %v168
    %200 = vmatpush.bf16.msra.mxu0 %v167
    %201 = vmatpush.bf16.msra.mxu0 %v166
    %202 = vmatpush.bf16.msra.mxu0 %v165
    %203 = vmatpush.bf16.msra.mxu0 %v164
    %204 = vmatmul.bf16.gmra.mxu0 %v96
    %v205 = vpop.f32.mrf.mxu0
    %v206 = vadd.f32 0.0, %v205
    %v207 = vpop.f32.mrf.mxu0
    %208 = vdwg.mxu0
    %209 = vmatpush.bf16.msra.mxu0 %v179
    %210 = vmatpush.bf16.msra.mxu0 %v178
    %211 = vmatpush.bf16.msra.mxu0 %v177
    %212 = vmatpush.bf16.msra.mxu0 %v176
    %213 = vmatpush.bf16.msra.mxu0 %v175
    %214 = vmatpush.bf16.msra.mxu0 %v174
    %215 = vmatpush.bf16.msra.mxu0 %v173
    %216 = vmatpush.bf16.msra.mxu0 %v172
    %217 = vmatmul.bf16.gmra.mxu0 %v97
    %v218 = vpop.f32.mrf.mxu0
    %v219 = vadd.f32 %v206, %v218
    %v220 = vpop.f32.mrf.mxu0
    %221 = vdwg.mxu0
    %v222 = vmax.f32 %v219, 0.0
    %v223 = vpack.c.bf16 %v222, %v222
    %v224 = vld [vmem:[#allocation7] sm:$0xf]
    %v225 = vld [vmem:[#allocation7 + $0x4] sm:$0xf]
    %v226 = vld [vmem:[#allocation7 + $0x8] sm:$0xf]
    %v227 = vld [vmem:[#allocation7 + $0xc] sm:$0xf]
    %v228 = vld [vmem:[#allocation7 + $0x10] sm:$0xf]
    %v229 = vld [vmem:[#allocation7 + $0x14] sm:$0xf]
    %v230 = vld [vmem:[#allocation7 + $0x18] sm:$0xf]
    %v231 = vld [vmem:[#allocation7 + $0x1c] sm:$0xf]
    %v232 = vld [vmem:[#allocation7 + $0x20] sm:$0xf]
    %v233 = vld [vmem:[#allocation7 + $0x24] sm:$0xf]
    %v234 = vld [vmem:[#allocation7 + $0x28] sm:$0xf]
    %v235 = vld [vmem:[#allocation7 + $0x2c] sm:$0xf]
    %v236 = vld [vmem:[#allocation7 + $0x30] sm:$0xf]
    %v237 = vld [vmem:[#allocation7 + $0x34] sm:$0xf]
    %v238 = vld [vmem:[#allocation7 + $0x38] sm:$0xf]
    %v239 = vld [vmem:[#allocation7 + $0x3c] sm:$0xf]
    %v256 = vunpack.c.l.b16 %v224
    %v257 = vunpack.c.l.b16 %v225
    %v258 = vunpack.c.l.b16 %v226
    %v259 = vunpack.c.l.b16 %v227
    %v260 = vunpack.c.l.b16 %v228
    %v261 = vunpack.c.l.b16 %v229
    %v262 = vunpack.c.l.b16 %v230
    %v263 = vunpack.c.l.b16 %v231
    %v264 = vunpack.c.l.b16 %v232
    %v265 = vunpack.c.l.b16 %v233
    %v266 = vunpack.c.l.b16 %v234
    %v267 = vunpack.c.l.b16 %v235
    %v268 = vunpack.c.l.b16 %v236
    %v269 = vunpack.c.l.b16 %v237
    %v270 = vunpack.c.l.b16 %v238
    %v271 = vunpack.c.l.b16 %v239
    %v272 = vpack.c.b16 %v257, %v256
    %v273 = vpack.c.b16 %v259, %v258
    %v274 = vpack.c.b16 %v261, %v260
    %v275 = vpack.c.b16 %v263, %v262
    %v276 = vpack.c.b16 %v265, %v264
    %v277 = vpack.c.b16 %v267, %v266
    %v278 = vpack.c.b16 %v269, %v268
    %v279 = vpack.c.b16 %v271, %v270
    %288 = vmatpush.bf16.msra.mxu0 %v279
    %289 = vmatpush.bf16.msra.mxu0 %v278
    %290 = vmatpush.bf16.msra.mxu0 %v277
    %291 = vmatpush.bf16.msra.mxu0 %v276
    %292 = vmatpush.bf16.msra.mxu0 %v275
    %293 = vmatpush.bf16.msra.mxu0 %v274
    %294 = vmatpush.bf16.msra.mxu0 %v273
    %295 = vmatpush.bf16.msra.mxu0 %v272
    %296 = vmatmul.bf16.gmra.mxu0 %v223
    %v297 = vpop.f32.mrf.mxu0
    %v298 = vadd.f32 0.0, %v297
    %v299 = vpop.f32.mrf.mxu0
    %300 = vdwg.mxu0
    %301 = vst [vmem:[#allocation8] sm:$0xff] %v298
    // Predicated region
    $region26: #{tpu_custom_call.1} parent=1 // pred_check
      _
    $region27: #{tpu_custom_call.1} parent=1 // pred_check_branch
      %303 = sbr.rel (0) target = $region29
    $region28: #{tpu_custom_call.1} parent=1 // pred_region
      %305 = vsyncadd [#allocation4], 0
      %s307 = sshll.u32 [#allocation8], 4
      %s308 = int_to_ptr.vmem [resolvable:$true] %s307
      %s309 = sshll.u32 %s3, 4
      %s310 = int_to_ptr.hbm [resolvable:$true] %s309
      %312 = dma.vmem_to_hbm [thread:$0]  %s308, 128, %s310, [#allocation4]
    $region29: #{tpu_custom_call.1} parent=1 // pred_fallthru
      _
    // Predicated region
    $region30: #{tpu_custom_call.1} parent=1 // pred_check
      _
    $region31: #{tpu_custom_call.1} parent=1 // pred_check_branch
      %314 = sbr.rel (0) target = $region33
    $region32: #{tpu_custom_call.1} parent=1 // pred_region
      %316 = dma.done [#allocation4], 128
    $region33: #{tpu_custom_call.1} parent=1 // pred_fallthru
      _
    %317 = vsyncpa [#allocation3], 1
    %318 = vsyncpa [#allocation6], 1
    %319 = vsyncpa [#allocation4], 1

</llo_original>
